<compile_context>
chip_gen: v7x
topology: tpu7x:2x2x1
jax: 0.10.0
libtpu: 0.0.40
codegen_flags: <defaults>
</compile_context>

<pallas_src>
import math

import jax
import jax.numpy as jnp
from jax.experimental import pallas as pl
from jax.experimental.pallas import tpu as pltpu


def _cdiv(a, b):
    return -(-a // b)


def _single_block_kernel(x_ref, m_ref, o_ref):
    # x_ref: (n, group, C); m_ref: (n, 1, C). Whole problem in one VMEM block.
    o_ref[...] = x_ref[...] * m_ref[...]


def _tiled_kernel(x_ref, m_ref, o_ref):
    # x_ref/o_ref: (1, TILE_R, W) slab belonging to mask group g.
    # m_ref: full (n, W) mask table, VMEM-resident across the whole grid.
    g = pl.program_id(1)
    m_row = m_ref[pl.ds(g, 1), :]                 # (1, W)
    o_ref[...] = x_ref[...] * m_row[None, :, :]   # (1, TILE_R, W) * (1, 1, W)


def _largest_divisor_leq(x, bound):
    best = 1
    i = 1
    while i * i <= x:
        if x % i == 0:
            for d in (i, x // i):
                if best < d <= bound:
                    best = d
        i += 1
    return best


def _choose_fold(group, channels, lane_cap=1024):
    """Fold factor f (divides group): layout (group, C) -> (group//f, C*f)."""
    base = 128 // math.gcd(channels, 128)
    if group % base == 0:
        # Lane-dense: C*f is a multiple of 128 => unmasked full-width stores.
        f = base
        while group % (2 * f) == 0 and channels * 2 * f <= lane_cap:
            f *= 2  # widen lanes: longer contiguous DMA rows, same store count
        return f
    # Non-foldable fallback: widest divisor of `group` that keeps W <= cap,
    # so lane utilisation never collapses to bare C (e.g. 16/128 lanes).
    return _largest_divisor_leq(group, max(1, lane_cap // channels))


def _chip_budget():
    """(target block bytes, vmem_limit_bytes) derived from the chip."""
    try:
        vmem_cap = int(pltpu.get_tpu_info().vmem_capacity_bytes)
    except Exception:
        vmem_cap = 64 << 20                         # conservative (v7x-sized)
    # ~4 MiB on v7x (64 MiB VMEM), ~8 MiB on v5e/v6e (128 MiB VMEM): keeps the
    # ~0.35 us per-step overhead well under 10% of the useful DMA time.
    target = max(4 << 20, min(8 << 20, vmem_cap // 16))
    # Double-buffered in + out blocks, plus mask table / compiler scratch.
    limit = min(vmem_cap, 5 * target + (4 << 20))
    return target, limit


def _pick_tile_rows(num_rows, width, itemsize, target_bytes):
    """Tile height: ~target_bytes per block, aligned to packed-tile height."""
    sublane = {1: 32, 2: 16}.get(itemsize, 8)       # int8/fp8 pack 32 rows
    rows = (target_bytes // max(1, width * itemsize)) // sublane * sublane
    rows = max(sublane, rows)
    if rows >= num_rows:
        return num_rows, sublane                    # full extent: always legal
    return rows, sublane


def _even_out_total_steps(num_rows, tile_r, n, sublane):
    """Nudge tile height so n * row_steps is even (balances v7x's 2 TCs)."""
    total = n * _cdiv(num_rows, tile_r)
    if total < 2 or total % 2 == 0:
        return tile_r
    t = min(tile_r, num_rows - 1) // sublane * sublane
    for _ in range(8):                              # bounded best-effort search
        if t < sublane:
            break
        if (n * _cdiv(num_rows, t)) % 2 == 0:
            return t
        t -= sublane
    return tile_r


def masksembles1d(inputs, masks, *, min_tiled_bytes=512 * 1024):
    """inputs: (N, C); masks: (n, C) binary. Returns (N, C)."""
    N, C = inputs.shape
    n = masks.shape[0]
    assert N % n == 0, "batch must be divisible by number of masks"
    group = N // n
    dtype = inputs.dtype
    itemsize = jnp.dtype(dtype).itemsize
    # TODO(synk): torch keeps masks as float64 so the torch output is promoted
    # to double; on TPU we compute and return in the input dtype.
    m = masks.astype(dtype)

    total_bytes = N * C * itemsize
    if total_bytes <= min_tiled_bytes:
        # Small-problem regime: one grid step, whole array resident in VMEM.
        out = pl.pallas_call(
            _single_block_kernel,
            out_shape=jax.ShapeDtypeStruct((n, group, C), dtype),
            grid=(1,),
            in_specs=[
                pl.BlockSpec((n, group, C), lambda i: (0, 0, 0)),
                pl.BlockSpec((n, 1, C), lambda i: (0, 0, 0)),
            ],
            out_specs=pl.BlockSpec((n, group, C), lambda i: (0, 0, 0)),
            compiler_params=pltpu.CompilerParams(
                dimension_semantics=("arbitrary",)),
        )(inputs.reshape(n, group, C), m.reshape(n, 1, C))
        return out.reshape(N, C)

    # Lane-dense fold: (group, C) -> (R, W); mask pre-tiled to width W.
    fold = _choose_fold(group, C)
    W = C * fold
    R = group // fold
    x3 = inputs.reshape(n, R, W)
    m2 = jnp.tile(m, (1, fold)) if fold > 1 else m      # (n, W)

    target_bytes, vmem_limit = _chip_budget()
    tile_r, sublane = _pick_tile_rows(R, W, itemsize, target_bytes)
    tile_r = _even_out_total_steps(R, tile_r, n, sublane)
    grid = (_cdiv(R, tile_r), n)   # row-tile axis first: balances the two
                                   # v7x TensorCores even when n is small

    out = pl.pallas_call(
        _tiled_kernel,
        out_shape=jax.ShapeDtypeStruct((n, R, W), dtype),
        grid=grid,
        in_specs=[
            # TODO(synk): pipeline_mode=pl.Buffered(3) is a possible small v7x
            # win; left at default depth 2 pending an xprof sweep.
            pl.BlockSpec((1, tile_r, W), lambda r, g: (g, r, 0)),
            pl.BlockSpec((n, W), lambda r, g: (0, 0)),   # resident mask table
        ],
        out_specs=pl.BlockSpec((1, tile_r, W), lambda r, g: (g, r, 0)),
        compiler_params=pltpu.CompilerParams(
            dimension_semantics=("parallel", "parallel"),
            vmem_limit_bytes=vmem_limit,
        ),
    )(x3, m2)
    return out.reshape(N, C)


def _reference(x, masks):
    n = masks.shape[0]
    N, C = x.shape
    group = N // n
    return (x.reshape(n, group, C) * masks.astype(x.dtype)[:, None, :]).reshape(N, C)


if __name__ == "__main__":
    # Module params: Masksembles1D(channels=16, n=4, scale=2.0)
    channels, n, scale = 16, 4, 2.0
    key = jax.random.PRNGKey(0)
    kx, km, kx2 = jax.random.split(key, 3)

    # Deterministic binary masks (n, channels), ~1/scale density.
    # TODO(synk): common.generation_wrapper binary-searches scale so each mask
    # has an exact active-channel count; here we synthesize a deterministic
    # binary mask of the right shape instead.
    masks = jax.random.bernoulli(km, p=1.0 / scale, shape=(n, channels)).astype(
        jnp.float32)

    # 1) Small-problem path (single block, one grid step).
    batch = 8
    x = jax.random.normal(kx, (batch, channels), dtype=jnp.float32)
    out = jax.block_until_ready(masksembles1d(x, masks))
    assert out.shape == (batch, channels)
    assert jnp.array_equal(out, _reference(x, masks))

    # 2) Lane-dense row-tiled path (group divisible by 128/gcd(C,128);
    #    lanes widened to min(group*C, 1024)).
    batch2 = n * 64
    x2 = jax.random.normal(kx2, (batch2, channels), dtype=jnp.float32)
    out2 = jax.block_until_ready(masksembles1d(x2, masks, min_tiled_bytes=0))
    assert jnp.array_equal(out2, _reference(x2, masks))

    # 3) Non-foldable fallback tiled path (group=2: lane dim widened to C*2).
    out3 = jax.block_until_ready(masksembles1d(x, masks, min_tiled_bytes=0))
    assert jnp.array_equal(out3, _reference(x, masks))

    print("KERNEL_OK")
</pallas_src>

<mosaic_0001>
module attributes {stable_mosaic.version = 11 : i64} {
  func.func @_single_block_kernel(%arg0: i32, %arg1: memref<4x2x16xf32, #tpu.memory_space<vmem>>, %arg2: memref<4x1x16xf32, #tpu.memory_space<vmem>>, %arg3: memref<4x2x16xf32, #tpu.memory_space<vmem>>) attributes {dimension_semantics = [#tpu.dimension_semantics<arbitrary>], iteration_bounds = array<i64: 1>, scalar_prefetch = 0 : i64, scratch_operands = 0 : i64, tpu.core_type = #tpu.core_type<tc>, window_params = [{pipeline_mode = #tpu.pipeline_mode<synchronous>, transform_indices = @transform_0, window_bounds = array<i64: 4, 2, 16>}, {pipeline_mode = #tpu.pipeline_mode<synchronous>, transform_indices = @transform_1, window_bounds = array<i64: 4, 1, 16>}, {pipeline_mode = #tpu.pipeline_mode<synchronous>, transform_indices = @transform_2, window_bounds = array<i64: 4, 2, 16>}]} {
    %c0 = arith.constant 0 : index
    %c0_0 = arith.constant 0 : index
    %c0_1 = arith.constant 0 : index
    %0 = vector.load %arg1[%c0, %c0_0, %c0_1] : memref<4x2x16xf32, #tpu.memory_space<vmem>>, vector<4x2x16xf32>
    %c0_2 = arith.constant 0 : index
    %c0_3 = arith.constant 0 : index
    %c0_4 = arith.constant 0 : index
    %1 = vector.load %arg2[%c0_2, %c0_3, %c0_4] : memref<4x1x16xf32, #tpu.memory_space<vmem>>, vector<4x1x16xf32>
    %2 = vector.broadcast %1 : vector<4x1x16xf32> to vector<4x2x16xf32>
    %3 = arith.mulf %0, %2 : vector<4x2x16xf32>
    %c0_5 = arith.constant 0 : index
    %c0_6 = arith.constant 0 : index
    %c0_7 = arith.constant 0 : index
    %4 = vector.load %arg3[%c0_5, %c0_6, %c0_7] : memref<4x2x16xf32, #tpu.memory_space<vmem>>, vector<4x2x16xf32>
    tpu.vector_store %arg3[%c0_5, %c0_6, %c0_7], %3 {strides = array<i32>} : memref<4x2x16xf32, #tpu.memory_space<vmem>>, vector<4x2x16xf32>,
    return
  }
  func.func @transform_0(%arg0: i32) -> (i32, i32, i32) {
    %c0_i32 = arith.constant 0 : i32
    %c0_i32_0 = arith.constant 0 : i32
    %c0_i32_1 = arith.constant 0 : i32
    %c0_i32_2 = arith.constant 0 : i32
    return %c0_i32, %c0_i32_0, %c0_i32_1 : i32, i32, i32
  }
  func.func @transform_1(%arg0: i32) -> (i32, i32, i32) {
    %c0_i32 = arith.constant 0 : i32
    %c0_i32_0 = arith.constant 0 : i32
    %c0_i32_1 = arith.constant 0 : i32
    %c0_i32_2 = arith.constant 0 : i32
    return %c0_i32, %c0_i32_0, %c0_i32_1 : i32, i32, i32
  }
  func.func @transform_2(%arg0: i32) -> (i32, i32, i32) {
    %c0_i32 = arith.constant 0 : i32
    %c0_i32_0 = arith.constant 0 : i32
    %c0_i32_1 = arith.constant 0 : i32
    %c0_i32_2 = arith.constant 0 : i32
    return %c0_i32, %c0_i32_0, %c0_i32_1 : i32, i32, i32
  }
}

</mosaic_0001>

<llo_original>
// kernel: tpu_custom_call.1
$region0: #{tpu_custom_call.1}
  #allocation0 [shape = 'u32[]', space=smem, size = 0x4, offset = 0x4, fixed_abs, tag = 'smem constant byte address 0x4 - core index']
  #allocation1 [shape = 'u32[144,128]{1,0:T(1,128)}', space=vmem, size = 0x12000, scoped, tag = 'internal scratch']
  %s0 = inlined_call_operand.hbm [shape: f32[4,2,16], index: 0, kind: input, shape index: {}]
  %s1 = inlined_call_operand.hbm [shape: f32[4,1,16], index: 1, kind: input, shape index: {}]
  %s2 = inlined_call_operand.hbm [shape: f32[4,2,16], index: 2, kind: output, shape index: {}]
  %s3 = sld [smem:[#allocation0]]
  $region26: #{tpu_custom_call.1} parent=0
    _
  %s5 = ssub.s32 1, %s3
  %s6 = scalar_select 0, %s5, %s3
  $region1: #{tpu_custom_call.1} parent=0
    #allocation2 [shape = 'u8[4096]{0}', space=vmem, size = 0x1000, scoped, tag = 'input window, operand 0, single buffered']
    #allocation3 [shape = 's32[1]{0}', space=sflag, size = 0x4, scoped, tag = 'scoped memory for tpu_custom_call.1']
    #allocation4 [shape = 's32[1]{0}', space=sflag, size = 0x4, scoped, tag = 'scoped memory for tpu_custom_call.1']
    #allocation5 [shape = 'u8[2048]{0}', space=vmem, size = 0x800, scoped, tag = 'input window, operand 1, single buffered']
    #allocation6 [shape = 's32[1]{0}', space=sflag, size = 0x4, scoped, tag = 'scoped memory for tpu_custom_call.1']
    #allocation7 [shape = 'u8[4096]{0}', space=vmem, size = 0x1000, scoped, tag = 'output window, operand 0, single buffered']
    %7 = vsyncpa [#allocation3], 0
    %8 = vsyncpa [#allocation6], 0
    %9 = vsyncpa [#allocation4], 0
    // Predicated region
    $region2: #{tpu_custom_call.1} parent=1 // pred_check
      _
    $region3: #{tpu_custom_call.1} parent=1 // pred_check_branch
      %11 = sbr.rel (0) target = $region5
    $region4: #{tpu_custom_call.1} parent=1 // pred_region
      %s13 = ssub.s32 128, 128
      %14 = vsyncadd [#allocation3], %s13
      %s15 = sshll.u32 [#allocation2], 4
      %s16 = int_to_ptr.vmem [resolvable:$true] %s15
      %21 = dma.hbm_to_vmem [thread:$0]  %s0, 128, %s16, [#allocation3], 32, 32, 2
    $region5: #{tpu_custom_call.1} parent=1 // pred_fallthru
      _
    // Predicated region
    $region6: #{tpu_custom_call.1} parent=1 // pred_check
      _
    $region7: #{tpu_custom_call.1} parent=1 // pred_check_branch
      %23 = sbr.rel (0) target = $region9
    $region8: #{tpu_custom_call.1} parent=1 // pred_region
      %s25 = ssub.s32 64, 64
      %26 = vsyncadd [#allocation6], %s25
      %s27 = sshll.u32 [#allocation5], 4
      %s28 = int_to_ptr.vmem [resolvable:$true] %s27
      %33 = dma.hbm_to_vmem [thread:$0]  %s1, 64, %s28, [#allocation6], 16, 16, 1
    $region9: #{tpu_custom_call.1} parent=1 // pred_fallthru
      _
    // Predicated region
    $region10: #{tpu_custom_call.1} parent=1 // pred_check
      _
    $region11: #{tpu_custom_call.1} parent=1 // pred_check_branch
      %35 = sbr.rel (0) target = $region13
    $region12: #{tpu_custom_call.1} parent=1 // pred_region
      %36 = dma.done [#allocation3], 128
    $region13: #{tpu_custom_call.1} parent=1 // pred_fallthru
      _
    // Predicated region
    $region14: #{tpu_custom_call.1} parent=1 // pred_check
      _
    $region15: #{tpu_custom_call.1} parent=1 // pred_check_branch
      %38 = sbr.rel (0) target = $region17
    $region16: #{tpu_custom_call.1} parent=1 // pred_region
      %39 = dma.done [#allocation6], 64
    $region17: #{tpu_custom_call.1} parent=1 // pred_fallthru
      _
    %v40 = vld [vmem:[#allocation2] sm:$0x3]
    %v41 = vld [vmem:[#allocation2 + $0x2] sm:$0x3]
    %v42 = vld [vmem:[#allocation2 + $0x4] sm:$0x3]
    %v43 = vld [vmem:[#allocation2 + $0x6] sm:$0x3]
    %v44 = vld [vmem:[#allocation5] sm:$0x1]
    %v45 = vld [vmem:[#allocation5 + $0x1] sm:$0x1]
    %v46 = vld [vmem:[#allocation5 + $0x2] sm:$0x1]
    %v47 = vld [vmem:[#allocation5 + $0x3] sm:$0x1]
    %v52 = vlaneseq
    %v53 = vshrl.u32 %v52, 7
    %v54 = vsub.s32 0, %v53
    %v55 = vrot.slane %v44, %v54
    %v56 = vlaneseq
    %v57 = vshrl.u32 %v56, 7
    %v58 = vsub.s32 0, %v57
    %v59 = vrot.slane %v45, %v58
    %v60 = vlaneseq
    %v61 = vshrl.u32 %v60, 7
    %v62 = vsub.s32 0, %v61
    %v63 = vrot.slane %v46, %v62
    %v64 = vlaneseq
    %v65 = vshrl.u32 %v64, 7
    %v66 = vsub.s32 0, %v65
    %v67 = vrot.slane %v47, %v66
    %v72 = vmul.f32 %v40, %v55
    %v73 = vmul.f32 %v41, %v59
    %v74 = vmul.f32 %v42, %v63
    %v75 = vmul.f32 %v43, %v67
    %vm76 = vcmask 123904
    %77 = vst.msk [vmem:[#allocation7] sm:$0x3] %vm76, %v72
    %78 = vst.msk [vmem:[#allocation7 + $0x2] sm:$0x3] %vm76, %v73
    %79 = vst.msk [vmem:[#allocation7 + $0x4] sm:$0x3] %vm76, %v74
    %80 = vst.msk [vmem:[#allocation7 + $0x6] sm:$0x3] %vm76, %v75
    // Predicated region
    $region18: #{tpu_custom_call.1} parent=1 // pred_check
      _
    $region19: #{tpu_custom_call.1} parent=1 // pred_check_branch
      %82 = sbr.rel (0) target = $region21
    $region20: #{tpu_custom_call.1} parent=1 // pred_region
      %s84 = ssub.s32 128, 128
      %85 = vsyncadd [#allocation4], %s84
      %s86 = sshll.u32 [#allocation7], 4
      %s87 = int_to_ptr.vmem [resolvable:$true] %s86
      %92 = dma.vmem_to_hbm [thread:$0]  %s87, 128, %s2, [#allocation4], 32, 32, 2
    $region21: #{tpu_custom_call.1} parent=1 // pred_fallthru
      _
    // Predicated region
    $region22: #{tpu_custom_call.1} parent=1 // pred_check
      _
    $region23: #{tpu_custom_call.1} parent=1 // pred_check_branch
      %94 = sbr.rel (0) target = $region25
    $region24: #{tpu_custom_call.1} parent=1 // pred_region
      %95 = dma.done [#allocation4], 128
    $region25: #{tpu_custom_call.1} parent=1 // pred_fallthru
      _
    %96 = vsyncpa [#allocation3], 1
    %97 = vsyncpa [#allocation6], 1
    %98 = vsyncpa [#allocation4], 1

</llo_original>
